<compile_context>
chip_gen: v7x
topology: tpu7x:2x2x1
jax: 0.10.0
libtpu: 0.0.40
codegen_flags: <defaults>
</compile_context>

<pallas_src>
import functools
import math

import jax
import jax.numpy as jnp
from jax import lax
from jax.experimental import pallas as pl
from jax.experimental.pallas import tpu as pltpu

_LANE = 128
_SUBLANE = 8


def _round_up(x, m):
    return ((x + m - 1) // m) * m


def _attention_self_kernel(x_ref, w_ref, b_ref, o_ref, *,
                           scale, dk_pad, s_real, mxu_dtype, approx_recip):
    # x_ref: (bb, s_pad, d_in_pad)
    # w_ref: (d_in_pad, 2*dk_pad + dv_pad)   fused [Wq | Wk | Wv]
    # b_ref: (1, 2*dk_pad + dv_pad)          fused f32 biases
    # o_ref: (bb, s_pad, out_w)              out_w = dim_v or dv_pad
    bb, s_pad, d_in = x_ref.shape
    w_tot = w_ref.shape[1]
    dv_pad = w_tot - 2 * dk_pad

    # Fused Q/K/V projection: a single MXU matmul over all bb*s_pad rows.
    x2 = x_ref[...].reshape(bb * s_pad, d_in)
    qkv = jnp.dot(x2, w_ref[...], preferred_element_type=jnp.float32) + b_ref[...]

    q = qkv[:, :dk_pad].reshape(bb, s_pad, dk_pad)
    k = qkv[:, dk_pad:2 * dk_pad].reshape(bb, s_pad, dk_pad)
    v = qkv[:, 2 * dk_pad:].reshape(bb, s_pad, dv_pad)

    # scores = Q @ K^T, contracting the last dim of both operands (no K
    # transpose through the XLU); bf16 operands, f32 accumulation.
    scores = jnp.einsum("bqd,bkd->bqk",
                        q.astype(mxu_dtype), k.astype(mxu_dtype),
                        preferred_element_type=jnp.float32)      # (bb,S,S) f32

    if s_pad != s_real:
        # Mask padded key columns so seq padding is exact.
        key_id = lax.broadcasted_iota(jnp.int32, scores.shape, 2)
        scores = jnp.where(key_id < s_real, scores, -1e30)

    # Numerically stable softmax over the last axis.  The post-softmax
    # 1/sqrt(dim_k) scale is folded into the denominator reciprocal, and
    # normalization is deferred past the PV matmul: we multiply the small
    # (bb,S,dv) result instead of the (bb,S,S) probability tile.
    m = jnp.max(scores, axis=-1, keepdims=True)
    e = jnp.exp(scores - m)
    denom = jnp.sum(e, axis=-1, keepdims=True)
    inv = pl.reciprocal(denom, approx=approx_recip) * scale       # (bb,S,1) f32

    out = jnp.einsum("bqk,bkv->bqv",
                     e.astype(mxu_dtype), v.astype(mxu_dtype),
                     preferred_element_type=jnp.float32)          # (bb,S,dv) f32
    out = out * inv                                               # deferred norm

    o_ref[...] = out[..., :o_ref.shape[-1]].astype(o_ref.dtype)


def attention_self(x, wq, bq, wk, bk, wv, bv, dim_k, *,
                   block_b=None,
                   mxu_dtype=jnp.bfloat16,
                   approx_reciprocal=True,
                   pad_output=False,
                   vmem_budget_bytes=40 * 1024 * 1024):
    """x: (B, S, D_in); wq/wk: (D_in, dim_k); wv: (D_in, dim_v); biases 1-D."""
    B, S, D_in = x.shape
    dim_v = wv.shape[1]

    din_pad = _round_up(max(D_in, _LANE), _LANE)
    dk_pad = _round_up(max(dim_k, _LANE), _LANE)
    dv_pad = _round_up(max(dim_v, _LANE), _LANE)
    s_pad = _round_up(S, _SUBLANE)
    w_tot = 2 * dk_pad + dv_pad

    # Zero padding is exact: padded x columns multiply padded (zero) weight
    # rows, padded dk columns contribute 0 to QK^T, padded dv columns are
    # sliced off, and padded key rows are masked before the softmax.
    x_p = x
    if (s_pad, din_pad) != (S, D_in):
        x_p = jnp.pad(x, ((0, 0), (0, s_pad - S), (0, din_pad - D_in)))

    def pad_w(w, dout_pad):
        return jnp.pad(w, ((0, din_pad - D_in), (0, dout_pad - w.shape[1])))

    def pad_b(b, dout_pad):
        return jnp.pad(b.astype(jnp.float32).reshape(1, -1),
                       ((0, 0), (0, dout_pad - b.shape[0])))

    # Fused, grid-invariant weight/bias operands (single DMA, single matmul).
    w = jnp.concatenate([pad_w(wq, dk_pad), pad_w(wk, dk_pad), pad_w(wv, dv_pad)],
                        axis=1)
    bias = jnp.concatenate([pad_b(bq, dk_pad), pad_b(bk, dk_pad), pad_b(bv, dv_pad)],
                           axis=1)

    out_w = dv_pad if pad_output else dim_v
    x_bytes = jnp.dtype(x.dtype).itemsize
    w_bytes = jnp.dtype(w.dtype).itemsize
    mxu_bytes = jnp.dtype(mxu_dtype).itemsize

    def footprint(bb):
        # per-grid-step VMEM estimate (double-buffered x/out blocks, weights,
        # f32 + bf16 intermediates of the monolithic (S,S) path)
        f = 2 * bb * s_pad * din_pad * x_bytes              # x block
        f += 2 * bb * s_pad * out_w * x_bytes               # out block
        f += 2 * (din_pad * w_tot * w_bytes + w_tot * 4)    # weights + bias
        f += bb * s_pad * w_tot * 4                         # fused q|k|v (f32)
        f += bb * s_pad * w_tot * mxu_bytes                 # bf16 q/k/v copies
        f += 2 * bb * s_pad * s_pad * 4                     # scores + e (f32)
        f += bb * s_pad * s_pad * mxu_bytes                 # bf16 copy of e
        f += 2 * bb * s_pad * dv_pad * 4                    # PV result + out
        return f

    if block_b is None:
        divisors = [d for d in range(1, B + 1) if B % d == 0]
        fitting = [d for d in divisors if footprint(d) <= vmem_budget_bytes] or [1]
        # Fewest grid steps that still fit the VMEM budget (v5e/v6e: avoid
        # ~0.35us/step overhead on small problems).
        block_b = max(fitting)
        # For big problems prefer >=4 grid steps (>=2 per v7x TensorCore under
        # "parallel") while keeping >=256 projection rows per step for the MXU.
        for d in sorted(fitting, reverse=True):
            if B // d >= 4 and d * s_pad >= 256:
                block_b = d
                break
    assert B % block_b == 0, "batch must be divisible by block_b"

    vmem_limit = int(min(100 * 1024 * 1024,
                         max(32 * 1024 * 1024, int(footprint(block_b) * 1.5))))

    scale = 1.0 / math.sqrt(dim_k)
    kernel = functools.partial(
        _attention_self_kernel,
        scale=float(scale), dk_pad=dk_pad, s_real=S,
        mxu_dtype=mxu_dtype, approx_recip=bool(approx_reciprocal))

    out = pl.pallas_call(
        kernel,
        out_shape=jax.ShapeDtypeStruct((B, s_pad, out_w), x.dtype),
        grid_spec=pltpu.PrefetchScalarGridSpec(
            num_scalar_prefetch=0,
            grid=(B // block_b,),
            in_specs=[
                pl.BlockSpec((block_b, s_pad, din_pad), lambda b: (b, 0, 0)),  # x
                pl.BlockSpec((din_pad, w_tot), lambda b: (0, 0)),              # fused W
                pl.BlockSpec((1, w_tot), lambda b: (0, 0)),                    # fused bias
            ],
            out_specs=pl.BlockSpec((block_b, s_pad, out_w), lambda b: (b, 0, 0)),
        ),
        compiler_params=pltpu.CompilerParams(
            dimension_semantics=("parallel",),
            vmem_limit_bytes=vmem_limit),
    )(x_p, w, bias)

    if s_pad != S:
        out = out[:, :S, :]
    if out_w != dim_v:
        out = out[:, :, :dim_v]
    return out


def _reference(x, wq, bq, wk, bk, wv, bv, dim_k):
    q = x @ wq + bq
    k = x @ wk + bk
    v = x @ wv + bv
    scores = jnp.einsum("bsd,btd->bst", q, k)
    probs = jax.nn.softmax(scores, axis=-1) * (1.0 / math.sqrt(dim_k))
    return jnp.einsum("bst,btv->bsv", probs, v)


if __name__ == "__main__":
    # small shapes consistent with the module: batch=2, seq=8, input_dim=32,
    # dim_k=16, dim_v=16
    B, S, D_in, dim_k, dim_v = 2, 8, 32, 16, 16

    key = jax.random.PRNGKey(0)
    kx, kq, kbq, kk, kbk, kv, kbv = jax.random.split(key, 7)

    x = jax.random.normal(kx, (B, S, D_in), dtype=jnp.float32)

    # deterministic init mirroring nn.Linear's uniform(-1/sqrt(fan_in), ...);
    # weights stored pre-transposed as (D_in, D_out)
    bound = 1.0 / math.sqrt(D_in)
    wq = jax.random.uniform(kq, (D_in, dim_k), jnp.float32, -bound, bound)
    bq = jax.random.uniform(kbq, (dim_k,), jnp.float32, -bound, bound)
    wk = jax.random.uniform(kk, (D_in, dim_k), jnp.float32, -bound, bound)
    bk = jax.random.uniform(kbk, (dim_k,), jnp.float32, -bound, bound)
    wv = jax.random.uniform(kv, (D_in, dim_v), jnp.float32, -bound, bound)
    bv = jax.random.uniform(kbv, (dim_v,), jnp.float32, -bound, bound)

    ref = _reference(x, wq, bq, wk, bk, wv, bv, dim_k)

    # 1) exact-precision path (f32 MXU, exact reciprocal): tight tolerance
    out_exact = attention_self(x, wq, bq, wk, bk, wv, bv, dim_k,
                               mxu_dtype=jnp.float32, approx_reciprocal=False)
    out_exact = jax.block_until_ready(out_exact)
    assert out_exact.shape == (B, S, dim_v)
    assert jnp.allclose(out_exact, ref, atol=1e-5, rtol=1e-5), \
        "exact-mode mismatch vs JAX reference"

    # 2) default fast path (bf16 attention matmuls + EUP reciprocal)
    out_fast = jax.block_until_ready(
        attention_self(x, wq, bq, wk, bk, wv, bv, dim_k))
    assert out_fast.shape == (B, S, dim_v)
    assert jnp.allclose(out_fast, ref, atol=5e-2, rtol=5e-2), \
        "bf16-mode mismatch vs JAX reference"

    # 3) ragged seq length (S not a multiple of 8 -> padded + key-masked), exact mode
    S2 = 6
    x2 = x[:, :S2, :]
    out_ragged = jax.block_until_ready(
        attention_self(x2, wq, bq, wk, bk, wv, bv, dim_k,
                       mxu_dtype=jnp.float32, approx_reciprocal=False))
    ref2 = _reference(x2, wq, bq, wk, bk, wv, bv, dim_k)
    assert out_ragged.shape == (B, S2, dim_v)
    assert jnp.allclose(out_ragged, ref2, atol=1e-5, rtol=1e-5), \
        "padded-seq mismatch vs JAX reference"

    print("KERNEL_OK")
</pallas_src>

<mosaic_0001>
module attributes {stable_mosaic.version = 11 : i64} {
  func.func @_attention_self_kernel(%arg0: i32, %arg1: memref<2x8x128xf32, #tpu.memory_space<vmem>>, %arg2: memref<128x384xf32, #tpu.memory_space<vmem>>, %arg3: memref<1x384xf32, #tpu.memory_space<vmem>>, %arg4: memref<2x8x16xf32, #tpu.memory_space<vmem>>) attributes {dimension_semantics = [#tpu.dimension_semantics<parallel>], iteration_bounds = array<i64: 1>, scalar_prefetch = 0 : i64, scratch_operands = 0 : i64, tpu.core_type = #tpu.core_type<tc>, window_params = [{transform_indices = @transform_0, window_bounds = array<i64: 2, 8, 128>}, {pipeline_mode = #tpu.pipeline_mode<synchronous>, transform_indices = @transform_1, window_bounds = array<i64: 128, 384>}, {pipeline_mode = #tpu.pipeline_mode<synchronous>, transform_indices = @transform_2, window_bounds = array<i64: 1, 384>}, {transform_indices = @transform_3, window_bounds = array<i64: 2, 8, 16>}]} {
    %c0 = arith.constant 0 : index
    %c0_0 = arith.constant 0 : index
    %c0_1 = arith.constant 0 : index
    %0 = vector.load %arg1[%c0, %c0_0, %c0_1] : memref<2x8x128xf32, #tpu.memory_space<vmem>>, vector<2x8x128xf32>
    %1 = vector.shape_cast %0 : vector<2x8x128xf32> to vector<16x128xf32>
    %c0_2 = arith.constant 0 : index
    %c0_3 = arith.constant 0 : index
    %2 = vector.load %arg2[%c0_2, %c0_3] : memref<128x384xf32, #tpu.memory_space<vmem>>, vector<128x384xf32>
    %cst = arith.constant dense<0.000000e+00> : vector<16x384xf32>
    %3 = tpu.matmul %1, %2, %cst {dimension_numbers = #tpu.dot_dimension_numbers<[1], [0], [0], [1], [0, 0, 1, 1], [], []>} : vector<16x128xf32>, vector<128x384xf32>, vector<16x384xf32> -> vector<16x384xf32>
    %c0_4 = arith.constant 0 : index
    %c0_5 = arith.constant 0 : index
    %4 = vector.load %arg3[%c0_4, %c0_5] : memref<1x384xf32, #tpu.memory_space<vmem>>, vector<1x384xf32>
    %5 = vector.broadcast %4 : vector<1x384xf32> to vector<16x384xf32>
    %6 = arith.addf %3, %5 : vector<16x384xf32>
    %7 = vector.extract_strided_slice %6 {offsets = [0, 0], sizes = [16, 128], strides = [1, 1]} : vector<16x384xf32> to vector<16x128xf32>
    %8 = vector.shape_cast %7 : vector<16x128xf32> to vector<2x8x128xf32>
    %9 = vector.extract_strided_slice %6 {offsets = [0, 128], sizes = [16, 128], strides = [1, 1]} : vector<16x384xf32> to vector<16x128xf32>
    %10 = vector.shape_cast %9 : vector<16x128xf32> to vector<2x8x128xf32>
    %11 = vector.extract_strided_slice %6 {offsets = [0, 256], sizes = [16, 128], strides = [1, 1]} : vector<16x384xf32> to vector<16x128xf32>
    %12 = vector.shape_cast %11 : vector<16x128xf32> to vector<2x8x128xf32>
    "tpu.trace_start"() <{level = 10 : i32, message = "bqd,bkd->bqk"}> : () -> ()
    %cst_6 = arith.constant dense<0.000000e+00> : vector<2x8x8xf32>
    %13 = tpu.matmul %8, %10, %cst_6 {dimension_numbers = #tpu.dot_dimension_numbers<[2], [2], [1], [1], [0, 0, 0, 1, 1, 1], [0], [0]>} : vector<2x8x128xf32>, vector<2x8x128xf32>, vector<2x8x8xf32> -> vector<2x8x8xf32>
    "tpu.trace_stop"() : () -> ()
    %cst_7 = arith.constant dense<0xFF800000> : vector<2x8xf32>
    %14 = vector.multi_reduction <maximumf>, %13, %cst_7 [2] : vector<2x8x8xf32> to vector<2x8xf32>
    %15 = vector.shape_cast %14 : vector<2x8xf32> to vector<2x8x1xf32>
    %16 = vector.broadcast %15 : vector<2x8x1xf32> to vector<2x8x8xf32>
    %17 = arith.subf %13, %16 : vector<2x8x8xf32>
    %18 = math.exp %17 : vector<2x8x8xf32>
    %cst_8 = arith.constant dense<0.000000e+00> : vector<2x8xf32>
    %19 = vector.multi_reduction <add>, %18, %cst_8 [2] : vector<2x8x8xf32> to vector<2x8xf32>
    %20 = vector.shape_cast %19 : vector<2x8xf32> to vector<2x8x1xf32>
    %21 = tpu.reciprocal %20 : vector<2x8x1xf32> -> vector<2x8x1xf32>
    %cst_9 = arith.constant 2.500000e-01 : f32
    %22 = vector.broadcast %cst_9 : f32 to vector<2x8x1xf32>
    %23 = arith.mulf %21, %22 : vector<2x8x1xf32>
    "tpu.trace_start"() <{level = 10 : i32, message = "bqk,bkv->bqv"}> : () -> ()
    %cst_10 = arith.constant dense<0.000000e+00> : vector<2x8x128xf32>
    %24 = tpu.matmul %18, %12, %cst_10 {dimension_numbers = #tpu.dot_dimension_numbers<[2], [1], [1], [2], [0, 0, 0, 1, 1, 2], [0], [0]>} : vector<2x8x8xf32>, vector<2x8x128xf32>, vector<2x8x128xf32> -> vector<2x8x128xf32>
    "tpu.trace_stop"() : () -> ()
    %25 = vector.broadcast %23 : vector<2x8x1xf32> to vector<2x8x128xf32>
    %26 = arith.mulf %24, %25 : vector<2x8x128xf32>
    %27 = vector.extract_strided_slice %26 {offsets = [0, 0, 0], sizes = [2, 8, 16], strides = [1, 1, 1]} : vector<2x8x128xf32> to vector<2x8x16xf32>
    %c0_11 = arith.constant 0 : index
    %c0_12 = arith.constant 0 : index
    %c0_13 = arith.constant 0 : index
    %28 = vector.load %arg4[%c0_11, %c0_12, %c0_13] : memref<2x8x16xf32, #tpu.memory_space<vmem>>, vector<2x8x16xf32>
    tpu.vector_store %arg4[%c0_11, %c0_12, %c0_13], %27 {strides = array<i32>} : memref<2x8x16xf32, #tpu.memory_space<vmem>>, vector<2x8x16xf32>,
    return
  }
  func.func @transform_0(%arg0: i32) -> (i32, i32, i32) {
    %c0_i32 = arith.constant 0 : i32
    %c0_i32_0 = arith.constant 0 : i32
    %c0_i32_1 = arith.constant 0 : i32
    return %arg0, %c0_i32, %c0_i32_0 : i32, i32, i32
  }
  func.func @transform_1(%arg0: i32) -> (i32, i32) {
    %c0_i32 = arith.constant 0 : i32
    %c0_i32_0 = arith.constant 0 : i32
    %c0_i32_1 = arith.constant 0 : i32
    return %c0_i32, %c0_i32_0 : i32, i32
  }
  func.func @transform_2(%arg0: i32) -> (i32, i32) {
    %c0_i32 = arith.constant 0 : i32
    %c0_i32_0 = arith.constant 0 : i32
    %c0_i32_1 = arith.constant 0 : i32
    return %c0_i32, %c0_i32_0 : i32, i32
  }
  func.func @transform_3(%arg0: i32) -> (i32, i32, i32) {
    %c0_i32 = arith.constant 0 : i32
    %c0_i32_0 = arith.constant 0 : i32
    %c0_i32_1 = arith.constant 0 : i32
    return %arg0, %c0_i32, %c0_i32_0 : i32, i32, i32
  }
}

</mosaic_0001>

<llo_original>
// kernel: tpu_custom_call.1
$region0: #{tpu_custom_call.1}
  #allocation0 [shape = 'u32[]', space=smem, size = 0x4, offset = 0x4, fixed_abs, tag = 'smem constant byte address 0x4 - core index']
  #allocation1 [shape = 'u32[144,128]{1,0:T(1,128)}', space=vmem, size = 0x12000, scoped, tag = 'internal scratch']
  %s0 = inlined_call_operand.hbm [shape: f32[2,8,128], index: 0, kind: input, shape index: {}]
  %s1 = inlined_call_operand.hbm [shape: f32[128,384], index: 1, kind: input, shape index: {}]
  %s2 = inlined_call_operand.vmem [shape: f32[1,384], index: 2, kind: input, shape index: {}]
  %s3 = inlined_call_operand.hbm [shape: f32[2,8,16], index: 3, kind: output, shape index: {}]
  %s4 = sld [smem:[#allocation0]]
  $region30: #{tpu_custom_call.1} parent=0
    _
  %s6 = ssub.s32 1, %s4
  %s7 = scalar_select 0, %s6, %s4
  $region1: #{tpu_custom_call.1} parent=0
    #allocation2 [shape = 'u8[8192]{0}', space=vmem, size = 0x2000, scoped, tag = 'input window, operand 0, single buffered']
    #allocation3 [shape = 's32[1]{0}', space=sflag, size = 0x4, scoped, tag = 'scoped memory for tpu_custom_call.1']
    #allocation4 [shape = 's32[1]{0}', space=sflag, size = 0x4, scoped, tag = 'scoped memory for tpu_custom_call.1']
    #allocation5 [shape = 'u8[196608]{0}', space=vmem, size = 0x30000, scoped, tag = 'input window, operand 1, single buffered']
    #allocation6 [shape = 's32[1]{0}', space=sflag, size = 0x4, scoped, tag = 'scoped memory for tpu_custom_call.1']
    #allocation7 [shape = 'u8[8192]{0}', space=vmem, size = 0x2000, scoped, tag = 'output window, operand 0, single buffered']
    %8 = vsyncpa [#allocation3], 0
    %9 = vsyncpa [#allocation6], 0
    %10 = vsyncpa [#allocation4], 0
    // Predicated region
    $region2: #{tpu_custom_call.1} parent=1 // pred_check
      _
    $region3: #{tpu_custom_call.1} parent=1 // pred_check_branch
      %12 = sbr.rel (0) target = $region5
    $region4: #{tpu_custom_call.1} parent=1 // pred_region
      %s14 = ssub.s32 256, 256
      %15 = vsyncadd [#allocation3], %s14
      %s16 = sshll.u32 [#allocation2], 4
      %s17 = int_to_ptr.vmem [resolvable:$true] %s16
      %22 = dma.hbm_to_vmem [thread:$0]  %s0, 256, %s17, [#allocation3], 128, 128, 8
    $region5: #{tpu_custom_call.1} parent=1 // pred_fallthru
      _
    // Predicated region
    $region6: #{tpu_custom_call.1} parent=1 // pred_check
      _
    $region7: #{tpu_custom_call.1} parent=1 // pred_check_branch
      %24 = sbr.rel (0) target = $region9
    $region8: #{tpu_custom_call.1} parent=1 // pred_region
      %s26 = ssub.s32 6144, 6144
      %27 = vsyncadd [#allocation6], %s26
      %s28 = sshll.u32 [#allocation5], 4
      %s29 = int_to_ptr.vmem [resolvable:$true] %s28
      %34 = dma.hbm_to_vmem [thread:$0]  %s1, 6144, %s29, [#allocation6], 384, 384, 24
    $region9: #{tpu_custom_call.1} parent=1 // pred_fallthru
      _
    // Predicated region
    $region10: #{tpu_custom_call.1} parent=1 // pred_check
      _
    $region11: #{tpu_custom_call.1} parent=1 // pred_check_branch
      %36 = sbr.rel (0) target = $region13
    $region12: #{tpu_custom_call.1} parent=1 // pred_region
      _
    $region13: #{tpu_custom_call.1} parent=1 // pred_fallthru
      _
    // Predicated region
    $region14: #{tpu_custom_call.1} parent=1 // pred_check
      _
    $region15: #{tpu_custom_call.1} parent=1 // pred_check_branch
      %38 = sbr.rel (0) target = $region17
    $region16: #{tpu_custom_call.1} parent=1 // pred_region
      %39 = dma.done [#allocation3], 256
    $region17: #{tpu_custom_call.1} parent=1 // pred_fallthru
      _
    // Predicated region
    $region18: #{tpu_custom_call.1} parent=1 // pred_check
      _
    $region19: #{tpu_custom_call.1} parent=1 // pred_check_branch
      %41 = sbr.rel (0) target = $region21
    $region20: #{tpu_custom_call.1} parent=1 // pred_region
      %42 = dma.done [#allocation6], 6144
    $region21: #{tpu_custom_call.1} parent=1 // pred_fallthru
      _
    %v43 = vld [vmem:[#allocation2] sm:$0xff]
    %v44 = vld [vmem:[#allocation2 + $0x8] sm:$0xff]
    %v45 = vld [vmem:[#allocation5] sm:$0xff]
    %v46 = vld [vmem:[#allocation5 + $0x8] sm:$0xff]
    %v47 = vld [vmem:[#allocation5 + $0x10] sm:$0xff]
    %v48 = vld [vmem:[#allocation5 + $0x18] sm:$0xff]
    %v49 = vld [vmem:[#allocation5 + $0x20] sm:$0xff]
    %v50 = vld [vmem:[#allocation5 + $0x28] sm:$0xff]
    %v51 = vld [vmem:[#allocation5 + $0x30] sm:$0xff]
    %v52 = vld [vmem:[#allocation5 + $0x38] sm:$0xff]
    %v53 = vld [vmem:[#allocation5 + $0x40] sm:$0xff]
    %v54 = vld [vmem:[#allocation5 + $0x48] sm:$0xff]
    %v55 = vld [vmem:[#allocation5 + $0x50] sm:$0xff]
    %v56 = vld [vmem:[#allocation5 + $0x58] sm:$0xff]
    %v57 = vld [vmem:[#allocation5 + $0x60] sm:$0xff]
    %v58 = vld [vmem:[#allocation5 + $0x68] sm:$0xff]
    %v59 = vld [vmem:[#allocation5 + $0x70] sm:$0xff]
    %v60 = vld [vmem:[#allocation5 + $0x78] sm:$0xff]
    %v61 = vld [vmem:[#allocation5 + $0x80] sm:$0xff]
    %v62 = vld [vmem:[#allocation5 + $0x88] sm:$0xff]
    %v63 = vld [vmem:[#allocation5 + $0x90] sm:$0xff]
    %v64 = vld [vmem:[#allocation5 + $0x98] sm:$0xff]
    %v65 = vld [vmem:[#allocation5 + $0xa0] sm:$0xff]
    %v66 = vld [vmem:[#allocation5 + $0xa8] sm:$0xff]
    %v67 = vld [vmem:[#allocation5 + $0xb0] sm:$0xff]
    %v68 = vld [vmem:[#allocation5 + $0xb8] sm:$0xff]
    %v69 = vld [vmem:[#allocation5 + $0xc0] sm:$0xff]
    %v70 = vld [vmem:[#allocation5 + $0xc8] sm:$0xff]
    %v71 = vld [vmem:[#allocation5 + $0xd0] sm:$0xff]
    %v72 = vld [vmem:[#allocation5 + $0xd8] sm:$0xff]
    %v73 = vld [vmem:[#allocation5 + $0xe0] sm:$0xff]
    %v74 = vld [vmem:[#allocation5 + $0xe8] sm:$0xff]
    %v75 = vld [vmem:[#allocation5 + $0xf0] sm:$0xff]
    %v76 = vld [vmem:[#allocation5 + $0xf8] sm:$0xff]
    %v77 = vld [vmem:[#allocation5 + $0x100] sm:$0xff]
    %v78 = vld [vmem:[#allocation5 + $0x108] sm:$0xff]
    %v79 = vld [vmem:[#allocation5 + $0x110] sm:$0xff]
    %v80 = vld [vmem:[#allocation5 + $0x118] sm:$0xff]
    %v81 = vld [vmem:[#allocation5 + $0x120] sm:$0xff]
    %v82 = vld [vmem:[#allocation5 + $0x128] sm:$0xff]
    %v83 = vld [vmem:[#allocation5 + $0x130] sm:$0xff]
    %v84 = vld [vmem:[#allocation5 + $0x138] sm:$0xff]
    %v85 = vld [vmem:[#allocation5 + $0x140] sm:$0xff]
    %v86 = vld [vmem:[#allocation5 + $0x148] sm:$0xff]
    %v87 = vld [vmem:[#allocation5 + $0x150] sm:$0xff]
    %v88 = vld [vmem:[#allocation5 + $0x158] sm:$0xff]
    %v89 = vld [vmem:[#allocation5 + $0x160] sm:$0xff]
    %v90 = vld [vmem:[#allocation5 + $0x168] sm:$0xff]
    %v91 = vld [vmem:[#allocation5 + $0x170] sm:$0xff]
    %v92 = vld [vmem:[#allocation5 + $0x178] sm:$0xff]
    %v93 = vld [vmem:[%s2] sm:$0x7]
    %v95 = vlaneseq
    %v96 = vshrl.u32 %v95, 7
    %v97 = vsub.s32 0, %v96
    %v98 = vrot.slane %v93, %v97
    %v99 = vlaneseq
    %v100 = vshrl.u32 %v99, 7
    %v101 = vsub.s32 1, %v100
    %v102 = vrot.slane %v93, %v101
    %v103 = vlaneseq
    %v104 = vshrl.u32 %v103, 7
    %v105 = vsub.s32 2, %v104
    %v106 = vrot.slane %v93, %v105
    %110 = vmatprep.subr.mxu0 %v46
    %111 = vmatpush1.msra.mxu0 %v45
    %112 = vmatprep.subr.mxu0 %v49
    %113 = vmatpush1.msra.mxu0 %v48
    %114 = vmatprep.subr.mxu0 %v52
    %115 = vmatpush1.msra.mxu0 %v51
    %116 = vmatprep.subr.mxu0 %v55
    %117 = vmatpush1.msra.mxu0 %v54
    %118 = vmatprep.subr.mxu0 %v58
    %119 = vmatpush1.msra.mxu0 %v57
    %120 = vmatprep.subr.mxu0 %v61
    %121 = vmatpush1.msra.mxu0 %v60
    %122 = vmatprep.subr.mxu0 %v64
    %123 = vmatpush1.msra.mxu0 %v63
    %124 = vmatprep.subr.mxu0 %v67
    %125 = vmatpush1.msra.mxu0 %v66
    %126 = vmatprep.subr.mxu0 %v70
    %127 = vmatpush1.msra.mxu0 %v69
    %128 = vmatprep.subr.mxu0 %v73
    %129 = vmatpush1.msra.mxu0 %v72
    %130 = vmatprep.subr.mxu0 %v76
    %131 = vmatpush1.msra.mxu0 %v75
    %132 = vmatprep.subr.mxu0 %v79
    %133 = vmatpush1.msra.mxu0 %v78
    %134 = vmatprep.subr.mxu0 %v82
    %135 = vmatpush1.msra.mxu0 %v81
    %136 = vmatprep.subr.mxu0 %v85
    %137 = vmatpush1.msra.mxu0 %v84
    %138 = vmatprep.subr.mxu0 %v88
    %139 = vmatpush1.msra.mxu0 %v87
    %140 = vmatprep.subr.mxu0 %v91
    %141 = vmatpush1.msra.mxu0 %v90
    %142 = vmatprep.subr.mxu0 0.0
    %143 = vmatpush1.msra.mxu0 0.0
    %144 = vmatprep.subr.mxu0 0.0
    %145 = vmatpush1.msra.mxu0 0.0
    %146 = vmatprep.subr.mxu0 0.0
    %147 = vmatpush1.msra.mxu0 0.0
    %148 = vmatprep.subr.mxu0 0.0
    %149 = vmatpush1.msra.mxu0 0.0
    %150 = vmatprep.subr.mxu0 0.0
    %151 = vmatpush1.msra.mxu0 0.0
    %152 = vmatprep.subr.mxu0 0.0
    %153 = vmatpush1.msra.mxu0 0.0
    %154 = vmatprep.subr.mxu0 0.0
    %155 = vmatpush1.msra.mxu0 0.0
    %156 = vmatprep.subr.mxu0 0.0
    %157 = vmatpush1.msra.mxu0 0.0
    %158 = vmatprep.subr.mxu0 0.0
    %159 = vmatpush1.msra.mxu0 0.0
    %160 = vmatprep.subr.mxu0 0.0
    %161 = vmatpush1.msra.mxu0 0.0
    %162 = vmatprep.subr.mxu0 0.0
    %163 = vmatpush1.msra.mxu0 0.0
    %164 = vmatprep.subr.mxu0 0.0
    %165 = vmatpush1.msra.mxu0 0.0
    %166 = vmatprep.subr.mxu0 0.0
    %167 = vmatpush1.msra.mxu0 0.0
    %168 = vmatprep.subr.mxu0 0.0
    %169 = vmatpush1.msra.mxu0 0.0
    %170 = vmatprep.subr.mxu0 0.0
    %171 = vmatpush1.msra.mxu0 0.0
    %172 = vmatprep.subr.mxu0 0.0
    %173 = vmatpush1.msra.mxu0 0.0
    %174 = vmatprep.mubr.f32.mxu0 0.0
    %175 = vmatmul.mubr.f32.gmra.mrb[0].mxu0 %v43
    %v176 = vpop.f32.mrb[0].mxu0
    %v177 = vadd.f32 %v98, %v176
    %v178 = vpop.f32.mrb[0].mxu0
    %v179 = vadd.f32 %v102, %v178
    %180 = vmatprep.mubr.f32.mxu0 0.0
    %181 = vmatmul.mubr.f32.gmra.mrb[0].mxu0 %v44
    %v182 = vpop.f32.mrb[0].mxu0
    %v183 = vadd.f32 %v98, %v182
    %v184 = vpop.f32.mrb[0].mxu0
    %v185 = vadd.f32 %v102, %v184
    %186 = vdwg.mxu0
    %187 = vmatprep.subr.mxu0 0.0
    %188 = vmatpush1.msra.mxu0 %v47
    %189 = vmatprep.subr.mxu0 0.0
    %190 = vmatpush1.msra.mxu0 %v50
    %191 = vmatprep.subr.mxu0 0.0
    %192 = vmatpush1.msra.mxu0 %v53
    %193 = vmatprep.subr.mxu0 0.0
    %194 = vmatpush1.msra.mxu0 %v56
    %195 = vmatprep.subr.mxu0 0.0
    %196 = vmatpush1.msra.mxu0 %v59
    %197 = vmatprep.subr.mxu0 0.0
    %198 = vmatpush1.msra.mxu0 %v62
    %199 = vmatprep.subr.mxu0 0.0
    %200 = vmatpush1.msra.mxu0 %v65
    %201 = vmatprep.subr.mxu0 0.0
    %202 = vmatpush1.msra.mxu0 %v68
    %203 = vmatprep.subr.mxu0 0.0
    %204 = vmatpush1.msra.mxu0 %v71
    %205 = vmatprep.subr.mxu0 0.0
    %206 = vmatpush1.msra.mxu0 %v74
    %207 = vmatprep.subr.mxu0 0.0
    %208 = vmatpush1.msra.mxu0 %v77
    %209 = vmatprep.subr.mxu0 0.0
    %210 = vmatpush1.msra.mxu0 %v80
    %211 = vmatprep.subr.mxu0 0.0
    %212 = vmatpush1.msra.mxu0 %v83
    %213 = vmatprep.subr.mxu0 0.0
    %214 = vmatpush1.msra.mxu0 %v86
    %215 = vmatprep.subr.mxu0 0.0
    %216 = vmatpush1.msra.mxu0 %v89
    %217 = vmatprep.subr.mxu0 0.0
    %218 = vmatpush1.msra.mxu0 %v92
    %219 = vmatprep.subr.mxu0 0.0
    %220 = vmatpush1.msra.mxu0 0.0
    %221 = vmatprep.subr.mxu0 0.0
    %222 = vmatpush1.msra.mxu0 0.0
    %223 = vmatprep.subr.mxu0 0.0
    %224 = vmatpush1.msra.mxu0 0.0
    %225 = vmatprep.subr.mxu0 0.0
    %226 = vmatpush1.msra.mxu0 0.0
    %227 = vmatprep.subr.mxu0 0.0
    %228 = vmatpush1.msra.mxu0 0.0
    %229 = vmatprep.subr.mxu0 0.0
    %230 = vmatpush1.msra.mxu0 0.0
    %231 = vmatprep.subr.mxu0 0.0
    %232 = vmatpush1.msra.mxu0 0.0
    %233 = vmatprep.subr.mxu0 0.0
    %234 = vmatpush1.msra.mxu0 0.0
    %235 = vmatprep.subr.mxu0 0.0
    %236 = vmatpush1.msra.mxu0 0.0
    %237 = vmatprep.subr.mxu0 0.0
    %238 = vmatpush1.msra.mxu0 0.0
    %239 = vmatprep.subr.mxu0 0.0
    %240 = vmatpush1.msra.mxu0 0.0
    %241 = vmatprep.subr.mxu0 0.0
    %242 = vmatpush1.msra.mxu0 0.0
    %243 = vmatprep.subr.mxu0 0.0
    %244 = vmatpush1.msra.mxu0 0.0
    %245 = vmatprep.subr.mxu0 0.0
    %246 = vmatpush1.msra.mxu0 0.0
    %247 = vmatprep.subr.mxu0 0.0
    %248 = vmatpush1.msra.mxu0 0.0
    %249 = vmatprep.subr.mxu0 0.0
    %250 = vmatpush1.msra.mxu0 0.0
    %251 = vmatprep.mubr.f32.mxu0 0.0
    %252 = vmatmul.mubr.f32.gmra.mrb[0].mxu0 %v43
    %v253 = vpop.f32.mrb[0].mxu0
    %v254 = vadd.f32 %v106, %v253
    %v255 = vpop.f32.mrb[0].mxu0
    %256 = vmatprep.mubr.f32.mxu0 0.0
    %257 = vmatmul.mubr.f32.gmra.mrb[0].mxu0 %v44
    %v258 = vpop.f32.mrb[0].mxu0
    %v259 = vadd.f32 %v106, %v258
    %v260 = vpop.f32.mrb[0].mxu0
    %261 = vdwg.mxu0
    %262 = vmatprep.subr.mxu0 0.0
    %263 = vmatpush1.xpose.msra.mxu0 %v179
    %264 = vmatprep.subr.mxu0 0.0
    %265 = vmatpush1.xpose.msra.mxu0 0.0
    %266 = vmatprep.subr.mxu0 0.0
    %267 = vmatpush1.xpose.msra.mxu0 0.0
    %268 = vmatprep.subr.mxu0 0.0
    %269 = vmatpush1.xpose.msra.mxu0 0.0
    %270 = vmatprep.subr.mxu0 0.0
    %271 = vmatpush1.xpose.msra.mxu0 0.0
    %272 = vmatprep.subr.mxu0 0.0
    %273 = vmatpush1.xpose.msra.mxu0 0.0
    %274 = vmatprep.subr.mxu0 0.0
    %275 = vmatpush1.xpose.msra.mxu0 0.0
    %276 = vmatprep.subr.mxu0 0.0
    %277 = vmatpush1.xpose.msra.mxu0 0.0
    %278 = vmatprep.subr.mxu0 0.0
    %279 = vmatpush1.xpose.msra.mxu0 0.0
    %280 = vmatprep.subr.mxu0 0.0
    %281 = vmatpush1.xpose.msra.mxu0 0.0
    %282 = vmatprep.subr.mxu0 0.0
    %283 = vmatpush1.xpose.msra.mxu0 0.0
    %284 = vmatprep.subr.mxu0 0.0
    %285 = vmatpush1.xpose.msra.mxu0 0.0
    %286 = vmatprep.subr.mxu0 0.0
    %287 = vmatpush1.xpose.msra.mxu0 0.0
    %288 = vmatprep.subr.mxu0 0.0
    %289 = vmatpush1.xpose.msra.mxu0 0.0
    %290 = vmatprep.subr.mxu0 0.0
    %291 = vmatpush1.xpose.msra.mxu0 0.0
    %292 = vmatprep.subr.mxu0 0.0
    %293 = vmatpush1.xpose.msra.mxu0 0.0
    %294 = vmatprep.subr.mxu0 0.0
    %295 = vmatpush1.xpose.msra.mxu0 0.0
    %296 = vmatprep.subr.mxu0 0.0
    %297 = vmatpush1.xpose.msra.mxu0 0.0
    %298 = vmatprep.subr.mxu0 0.0
    %299 = vmatpush1.xpose.msra.mxu0 0.0
    %300 = vmatprep.subr.mxu0 0.0
    %301 = vmatpush1.xpose.msra.mxu0 0.0
    %302 = vmatprep.subr.mxu0 0.0
    %303 = vmatpush1.xpose.msra.mxu0 0.0
    %304 = vmatprep.subr.mxu0 0.0
    %305 = vmatpush1.xpose.msra.mxu0 0.0
    %306 = vmatprep.subr.mxu0 0.0
    %307 = vmatpush1.xpose.msra.mxu0 0.0
    %308 = vmatprep.subr.mxu0 0.0
    %309 = vmatpush1.xpose.msra.mxu0 0.0
    %310 = vmatprep.subr.mxu0 0.0
    %311 = vmatpush1.xpose.msra.mxu0 0.0
    %312 = vmatprep.subr.mxu0 0.0
    %313 = vmatpush1.xpose.msra.mxu0 0.0
    %314 = vmatprep.subr.mxu0 0.0
    %315 = vmatpush1.xpose.msra.mxu0 0.0
    %316 = vmatprep.subr.mxu0 0.0
    %317 = vmatpush1.xpose.msra.mxu0 0.0
    %318 = vmatprep.subr.mxu0 0.0
    %319 = vmatpush1.xpose.msra.mxu0 0.0
    %320 = vmatprep.subr.mxu0 0.0
    %321 = vmatpush1.xpose.msra.mxu0 0.0
    %322 = vmatprep.subr.mxu0 0.0
    %323 = vmatpush1.xpose.msra.mxu0 0.0
    %324 = vmatprep.subr.mxu0 0.0
    %325 = vmatpush1.xpose.msra.mxu0 0.0
    %326 = vmatprep.mubr.f32.mxu0 0.0
    %327 = vmatmul.mubr.f32.gmra.mrb[0].mxu0 %v177
    %v328 = vpop.f32.mrb[0].mxu0
    %v329 = vadd.f32 0.0, %v328
    %v330 = vpop.f32.mrb[0].mxu0
    %331 = vdwg.mxu0
    %332 = vmatprep.subr.mxu0 0.0
    %333 = vmatpush1.xpose.msra.mxu0 %v185
    %334 = vmatprep.subr.mxu0 0.0
    %335 = vmatpush1.xpose.msra.mxu0 0.0
    %336 = vmatprep.subr.mxu0 0.0
    %337 = vmatpush1.xpose.msra.mxu0 0.0
    %338 = vmatprep.subr.mxu0 0.0
    %339 = vmatpush1.xpose.msra.mxu0 0.0
    %340 = vmatprep.subr.mxu0 0.0
    %341 = vmatpush1.xpose.msra.mxu0 0.0
    %342 = vmatprep.subr.mxu0 0.0
    %343 = vmatpush1.xpose.msra.mxu0 0.0
    %344 = vmatprep.subr.mxu0 0.0
    %345 = vmatpush1.xpose.msra.mxu0 0.0
    %346 = vmatprep.subr.mxu0 0.0
    %347 = vmatpush1.xpose.msra.mxu0 0.0
    %348 = vmatprep.subr.mxu0 0.0
    %349 = vmatpush1.xpose.msra.mxu0 0.0
    %350 = vmatprep.subr.mxu0 0.0
    %351 = vmatpush1.xpose.msra.mxu0 0.0
    %352 = vmatprep.subr.mxu0 0.0
    %353 = vmatpush1.xpose.msra.mxu0 0.0
    %354 = vmatprep.subr.mxu0 0.0
    %355 = vmatpush1.xpose.msra.mxu0 0.0
    %356 = vmatprep.subr.mxu0 0.0
    %357 = vmatpush1.xpose.msra.mxu0 0.0
    %358 = vmatprep.subr.mxu0 0.0
    %359 = vmatpush1.xpose.msra.mxu0 0.0
    %360 = vmatprep.subr.mxu0 0.0
    %361 = vmatpush1.xpose.msra.mxu0 0.0
    %362 = vmatprep.subr.mxu0 0.0
    %363 = vmatpush1.xpose.msra.mxu0 0.0
    %364 = vmatprep.subr.mxu0 0.0
    %365 = vmatpush1.xpose.msra.mxu0 0.0
    %366 = vmatprep.subr.mxu0 0.0
    %367 = vmatpush1.xpose.msra.mxu0 0.0
    %368 = vmatprep.subr.mxu0 0.0
    %369 = vmatpush1.xpose.msra.mxu0 0.0
    %370 = vmatprep.subr.mxu0 0.0
    %371 = vmatpush1.xpose.msra.mxu0 0.0
    %372 = vmatprep.subr.mxu0 0.0
    %373 = vmatpush1.xpose.msra.mxu0 0.0
    %374 = vmatprep.subr.mxu0 0.0
    %375 = vmatpush1.xpose.msra.mxu0 0.0
    %376 = vmatprep.subr.mxu0 0.0
    %377 = vmatpush1.xpose.msra.mxu0 0.0
    %378 = vmatprep.subr.mxu0 0.0
    %379 = vmatpush1.xpose.msra.mxu0 0.0
    %380 = vmatprep.subr.mxu0 0.0
    %381 = vmatpush1.xpose.msra.mxu0 0.0
    %382 = vmatprep.subr.mxu0 0.0
    %383 = vmatpush1.xpose.msra.mxu0 0.0
    %384 = vmatprep.subr.mxu0 0.0
    %385 = vmatpush1.xpose.msra.mxu0 0.0
    %386 = vmatprep.subr.mxu0 0.0
    %387 = vmatpush1.xpose.msra.mxu0 0.0
    %388 = vmatprep.subr.mxu0 0.0
    %389 = vmatpush1.xpose.msra.mxu0 0.0
    %390 = vmatprep.subr.mxu0 0.0
    %391 = vmatpush1.xpose.msra.mxu0 0.0
    %392 = vmatprep.subr.mxu0 0.0
    %393 = vmatpush1.xpose.msra.mxu0 0.0
    %394 = vmatprep.subr.mxu0 0.0
    %395 = vmatpush1.xpose.msra.mxu0 0.0
    %396 = vmatprep.mubr.f32.mxu0 0.0
    %397 = vmatmul.mubr.f32.gmra.mrb[0].mxu0 %v183
    %v398 = vpop.f32.mrb[0].mxu0
    %v399 = vadd.f32 0.0, %v398
    %v400 = vpop.f32.mrb[0].mxu0
    %401 = vdwg.mxu0
    %vm402 = vcmask 64512
    %v403 = vsel %vm402, %v329, -inf
    %404 = vmax.xlane.f32.xlu0 %v403
    %v405 = vpop.xlane.xlu0 %404
    %v406 = vsel %vm402, %v399, -inf
    %407 = vmax.xlane.f32.xlu0 %v406
    %v408 = vpop.xlane.xlu0 %407
    %v409 = vsub.f32 %v329, %v405
    %v410 = vsub.f32 %v399, %v408
    %v411 = vmul.f32 %v409, 1.442695
    %v412 = vpow.pop %v411
    %v413 = vmul.f32 %v410, 1.442695
    %v414 = vpow.pop %v413
    %v415 = vsel %vm402, %v412, 0.0
    %416 = vadd.xlane.f32.xlu0 %v415
    %v417 = vpop.xlane.xlu0 %416
    %v418 = vsel %vm402, %v414, 0.0
    %419 = vadd.xlane.f32.xlu0 %v418
    %v420 = vpop.xlane.xlu0 %419
    %v421 = vrcp.pop %v417
    %v422 = vrcp.pop %v420
    %v423 = vmul.f32 %v421, 0.25
    %v424 = vmul.f32 %v422, 0.25
    %v426 = vsel %vm402, %v412, 0
    %428 = vmatprep.subr.mxu0 0.0
    %429 = vmatpush1.msra.mxu0 %v254
    %430 = vmatprep.subr.mxu0 0.0
    %431 = vmatpush1.msra.mxu0 0.0
    %432 = vmatprep.subr.mxu0 0.0
    %433 = vmatpush1.msra.mxu0 0.0
    %434 = vmatprep.subr.mxu0 0.0
    %435 = vmatpush1.msra.mxu0 0.0
    %436 = vmatprep.subr.mxu0 0.0
    %437 = vmatpush1.msra.mxu0 0.0
    %438 = vmatprep.subr.mxu0 0.0
    %439 = vmatpush1.msra.mxu0 0.0
    %440 = vmatprep.subr.mxu0 0.0
    %441 = vmatpush1.msra.mxu0 0.0
    %442 = vmatprep.subr.mxu0 0.0
    %443 = vmatpush1.msra.mxu0 0.0
    %444 = vmatprep.subr.mxu0 0.0
    %445 = vmatpush1.msra.mxu0 0.0
    %446 = vmatprep.subr.mxu0 0.0
    %447 = vmatpush1.msra.mxu0 0.0
    %448 = vmatprep.subr.mxu0 0.0
    %449 = vmatpush1.msra.mxu0 0.0
    %450 = vmatprep.subr.mxu0 0.0
    %451 = vmatpush1.msra.mxu0 0.0
    %452 = vmatprep.subr.mxu0 0.0
    %453 = vmatpush1.msra.mxu0 0.0
    %454 = vmatprep.subr.mxu0 0.0
    %455 = vmatpush1.msra.mxu0 0.0
    %456 = vmatprep.subr.mxu0 0.0
    %457 = vmatpush1.msra.mxu0 0.0
    %458 = vmatprep.subr.mxu0 0.0
    %459 = vmatpush1.msra.mxu0 0.0
    %460 = vmatprep.subr.mxu0 0.0
    %461 = vmatpush1.msra.mxu0 0.0
    %462 = vmatprep.subr.mxu0 0.0
    %463 = vmatpush1.msra.mxu0 0.0
    %464 = vmatprep.subr.mxu0 0.0
    %465 = vmatpush1.msra.mxu0 0.0
    %466 = vmatprep.subr.mxu0 0.0
    %467 = vmatpush1.msra.mxu0 0.0
    %468 = vmatprep.subr.mxu0 0.0
    %469 = vmatpush1.msra.mxu0 0.0
    %470 = vmatprep.subr.mxu0 0.0
    %471 = vmatpush1.msra.mxu0 0.0
    %472 = vmatprep.subr.mxu0 0.0
    %473 = vmatpush1.msra.mxu0 0.0
    %474 = vmatprep.subr.mxu0 0.0
    %475 = vmatpush1.msra.mxu0 0.0
    %476 = vmatprep.subr.mxu0 0.0
    %477 = vmatpush1.msra.mxu0 0.0
    %478 = vmatprep.subr.mxu0 0.0
    %479 = vmatpush1.msra.mxu0 0.0
    %480 = vmatprep.subr.mxu0 0.0
    %481 = vmatpush1.msra.mxu0 0.0
    %482 = vmatprep.subr.mxu0 0.0
    %483 = vmatpush1.msra.mxu0 0.0
    %484 = vmatprep.subr.mxu0 0.0
    %485 = vmatpush1.msra.mxu0 0.0
    %486 = vmatprep.subr.mxu0 0.0
    %487 = vmatpush1.msra.mxu0 0.0
    %488 = vmatprep.subr.mxu0 0.0
    %489 = vmatpush1.msra.mxu0 0.0
    %490 = vmatprep.subr.mxu0 0.0
    %491 = vmatpush1.msra.mxu0 0.0
    %492 = vmatprep.mubr.f32.mxu0 0.0
    %493 = vmatmul.mubr.f32.gmra.mrb[0].mxu0 %v426
    %v494 = vpop.f32.mrb[0].mxu0
    %v495 = vadd.f32 0.0, %v494
    %v496 = vpop.f32.mrb[0].mxu0
    %497 = vdwg.mxu0
    %v499 = vsel %vm402, %v414, 0
    %501 = vmatprep.subr.mxu0 0.0
    %502 = vmatpush1.msra.mxu0 %v259
    %503 = vmatprep.subr.mxu0 0.0
    %504 = vmatpush1.msra.mxu0 0.0
    %505 = vmatprep.subr.mxu0 0.0
    %506 = vmatpush1.msra.mxu0 0.0
    %507 = vmatprep.subr.mxu0 0.0
    %508 = vmatpush1.msra.mxu0 0.0
    %509 = vmatprep.subr.mxu0 0.0
    %510 = vmatpush1.msra.mxu0 0.0
    %511 = vmatprep.subr.mxu0 0.0
    %512 = vmatpush1.msra.mxu0 0.0
    %513 = vmatprep.subr.mxu0 0.0
    %514 = vmatpush1.msra.mxu0 0.0
    %515 = vmatprep.subr.mxu0 0.0
    %516 = vmatpush1.msra.mxu0 0.0
    %517 = vmatprep.subr.mxu0 0.0
    %518 = vmatpush1.msra.mxu0 0.0
    %519 = vmatprep.subr.mxu0 0.0
    %520 = vmatpush1.msra.mxu0 0.0
    %521 = vmatprep.subr.mxu0 0.0
    %522 = vmatpush1.msra.mxu0 0.0
    %523 = vmatprep.subr.mxu0 0.0
    %524 = vmatpush1.msra.mxu0 0.0
    %525 = vmatprep.subr.mxu0 0.0
    %526 = vmatpush1.msra.mxu0 0.0
    %527 = vmatprep.subr.mxu0 0.0
    %528 = vmatpush1.msra.mxu0 0.0
    %529 = vmatprep.subr.mxu0 0.0
    %530 = vmatpush1.msra.mxu0 0.0
    %531 = vmatprep.subr.mxu0 0.0
    %532 = vmatpush1.msra.mxu0 0.0
    %533 = vmatprep.subr.mxu0 0.0
    %534 = vmatpush1.msra.mxu0 0.0
    %535 = vmatprep.subr.mxu0 0.0
    %536 = vmatpush1.msra.mxu0 0.0
    %537 = vmatprep.subr.mxu0 0.0
    %538 = vmatpush1.msra.mxu0 0.0
    %539 = vmatprep.subr.mxu0 0.0
    %540 = vmatpush1.msra.mxu0 0.0
    %541 = vmatprep.subr.mxu0 0.0
    %542 = vmatpush1.msra.mxu0 0.0
    %543 = vmatprep.subr.mxu0 0.0
    %544 = vmatpush1.msra.mxu0 0.0
    %545 = vmatprep.subr.mxu0 0.0
    %546 = vmatpush1.msra.mxu0 0.0
    %547 = vmatprep.subr.mxu0 0.0
    %548 = vmatpush1.msra.mxu0 0.0
    %549 = vmatprep.subr.mxu0 0.0
    %550 = vmatpush1.msra.mxu0 0.0
    %551 = vmatprep.subr.mxu0 0.0
    %552 = vmatpush1.msra.mxu0 0.0
    %553 = vmatprep.subr.mxu0 0.0
    %554 = vmatpush1.msra.mxu0 0.0
    %555 = vmatprep.subr.mxu0 0.0
    %556 = vmatpush1.msra.mxu0 0.0
    %557 = vmatprep.subr.mxu0 0.0
    %558 = vmatpush1.msra.mxu0 0.0
    %559 = vmatprep.subr.mxu0 0.0
    %560 = vmatpush1.msra.mxu0 0.0
    %561 = vmatprep.subr.mxu0 0.0
    %562 = vmatpush1.msra.mxu0 0.0
    %563 = vmatprep.subr.mxu0 0.0
    %564 = vmatpush1.msra.mxu0 0.0
    %565 = vmatprep.mubr.f32.mxu0 0.0
    %566 = vmatmul.mubr.f32.gmra.mrb[0].mxu0 %v499
    %v567 = vpop.f32.mrb[0].mxu0
    %v568 = vadd.f32 0.0, %v567
    %v569 = vpop.f32.mrb[0].mxu0
    %570 = vdwg.mxu0
    %v571 = vmul.f32 %v495, %v423
    %v572 = vmul.f32 %v568, %v424
    %vm573 = vcmask 130048
    %574 = vst.msk [vmem:[#allocation7] sm:$0xff] %vm573, %v571
    %575 = vst.msk [vmem:[#allocation7 + $0x8] sm:$0xff] %vm573, %v572
    // Predicated region
    $region22: #{tpu_custom_call.1} parent=1 // pred_check
      _
    $region23: #{tpu_custom_call.1} parent=1 // pred_check_branch
      %577 = sbr.rel (0) target = $region25
    $region24: #{tpu_custom_call.1} parent=1 // pred_region
      %s579 = ssub.s32 256, 256
      %580 = vsyncadd [#allocation4], %s579
      %s581 = sshll.u32 [#allocation7], 4
      %s582 = int_to_ptr.vmem [resolvable:$true] %s581
      %587 = dma.vmem_to_hbm [thread:$0]  %s582, 256, %s3, [#allocation4], 128, 128, 8
    $region25: #{tpu_custom_call.1} parent=1 // pred_fallthru
      _
    // Predicated region
    $region26: #{tpu_custom_call.1} parent=1 // pred_check
      _
    $region27: #{tpu_custom_call.1} parent=1 // pred_check_branch
      %589 = sbr.rel (0) target = $region29
    $region28: #{tpu_custom_call.1} parent=1 // pred_region
      %590 = dma.done [#allocation4], 256
    $region29: #{tpu_custom_call.1} parent=1 // pred_fallthru
      _
    %591 = vsyncpa [#allocation3], 1
    %592 = vsyncpa [#allocation6], 1
    %593 = vsyncpa [#allocation4], 1

</llo_original>
